<compile_context>
chip_gen: v7x
topology: tpu7x:2x2x1
jax: 0.10.0
libtpu: 0.0.40
codegen_flags: <defaults>
</compile_context>

<pallas_src>
import jax
import jax.numpy as jnp
from jax import lax
from jax.experimental import pallas as pl
from jax.experimental.pallas import tpu as pltpu

R1 = 0.001
R2 = 0.001
EPS = 1e-9


def _round_up(x, n):
    return ((x + n - 1) // n) * n


def _cdiv(a, b):
    return -(-a // b)


def _device_kind():
    try:
        return jax.devices()[0].device_kind.lower()
    except Exception:
        return ""


def _default_nsplit():
    # Two TensorCores per chip only on v7x; elsewhere a second split is pure
    # extra accumulator init/writeback.
    kind = _device_kind()
    if "v7" in kind or "7x" in kind:
        return 2
    return 1


def _vmem_cap_bytes():
    kind = _device_kind()
    if "v7" in kind or "7x" in kind:
        return 56 << 20      # 64 MiB physical per TC, leave headroom
    return 100 << 20         # v5e / v6e: 128 MiB physical


def _choose_tile_m(m, nsplit):
    per_split = _cdiv(m, max(nsplit, 1))
    tile = min(16384, _round_up(per_split, 8))
    return max(8, tile)


# --------------------------------------------------------------------------
# Pallas kernel: fused streaming Gram  G += X_tile^T X_tile
# --------------------------------------------------------------------------
def _gram_kernel(x_ref, g_ref):
    @pl.when(pl.program_id(1) == 0)
    def _init():
        g_ref[...] = jnp.zeros_like(g_ref)

    x = x_ref[...]
    # Contract the sample axis (axis 0 of both operands) -> (k, k).
    # TODO(synk): inspect pl.lower_as_mlir to confirm Mosaic does not emit an
    # XLU transpose of the (tile_m, k) tile for this X^T X contraction.
    dn = (((0,), (0,)), ((), ()))
    g_ref[...] += lax.dot_general(x, x, dn,
                                  preferred_element_type=jnp.float32)


def _fused_gram(x, *, tile_m, nsplit):
    """x: (m_pad, k) f32 with invalid rows already zeroed.  Returns X^T X."""
    m_pad, k = x.shape
    total_tiles = m_pad // tile_m
    steps = total_tiles // nsplit
    assert steps * nsplit == total_tiles, (m_pad, tile_m, nsplit)

    # VMEM budget from actual (lane-padded) buffer needs: single input stream,
    # 2 pipeline buffers, plus the tiny double-buffered output accumulator.
    padded_k_lane = _round_up(k, 128)
    padded_k_sub = _round_up(k, 8)
    tile_bytes = _round_up(tile_m, 8) * padded_k_lane * 4
    out_bytes = padded_k_sub * padded_k_lane * 4
    vmem_bytes = 2 * tile_bytes + 2 * out_bytes + (2 << 20)
    vmem_bytes = int(min(max(vmem_bytes, 16 << 20), _vmem_cap_bytes()))

    cost = pl.CostEstimate(
        flops=2 * m_pad * k * k,
        transcendentals=0,
        bytes_accessed=m_pad * k * 4 + nsplit * k * k * 4,
    )

    g = pl.pallas_call(
        _gram_kernel,
        grid=(nsplit, steps),
        in_specs=[pl.BlockSpec((tile_m, k), lambda p, s: (p * steps + s, 0))],
        out_specs=pl.BlockSpec((None, k, k), lambda p, s: (p, 0, 0)),
        out_shape=jax.ShapeDtypeStruct((nsplit, k, k), jnp.float32),
        compiler_params=pltpu.CompilerParams(
            dimension_semantics=("parallel", "arbitrary"),
            vmem_limit_bytes=vmem_bytes),
        cost_estimate=cost,
    )(x)

    return jnp.sum(g, axis=0) if nsplit > 1 else g[0]


# --------------------------------------------------------------------------
# CCA loss
# --------------------------------------------------------------------------
def cca_loss(h1, h2, outdim_size, use_all_singular_values=False, *,
             tile_m=None, nsplit=None, use_pallas=None):
    """CCA loss; h1, h2 are (m, o) = (samples, features)."""
    h1 = jnp.asarray(h1, jnp.float32)
    h2 = jnp.asarray(h2, jnp.float32)
    m, o = h1.shape
    assert h2.shape == (m, o)
    k = 2 * o + 1

    if nsplit is None:
        nsplit = _default_nsplit()
    nsplit = max(1, int(nsplit))
    if use_pallas is None:
        # Small-problem fast path: pallas_call launch overhead dominates.
        use_pallas = (m * k * 4) >= (512 << 10)

    # Shift by a cheap prefix-mean pivot: covariance is shift-invariant and the
    # shift removes the one-pass-formula cancellation for large feature means.
    npiv = min(m, 256)
    piv1 = jnp.mean(h1[:npiv], axis=0, keepdims=True)
    piv2 = jnp.mean(h2[:npiv], axis=0, keepdims=True)
    h1s = h1 - piv1
    h2s = h2 - piv2

    if use_pallas:
        if tile_m is None:
            tile_m = _choose_tile_m(m, nsplit)
        tile_m = int(max(8, min(_round_up(int(tile_m), 8), _round_up(m, 8))))
        total_tiles = _cdiv(m, tile_m)
        steps = _cdiv(total_tiles, nsplit)
        m_pad = nsplit * steps * tile_m

        # Pack [h1s | h2s | 1] once (fuses with the pivot subtraction in XLA);
        # zero-pad extra rows so no in-kernel mask is needed (padded rows also
        # have a zero in the ones column, so they contribute nothing).
        ones = jnp.ones((m, 1), jnp.float32)
        x = jnp.concatenate([h1s, h2s, ones], axis=1)
        if m_pad != m:
            x = jnp.pad(x, ((0, m_pad - m), (0, 0)))

        g = _fused_gram(x, tile_m=tile_m, nsplit=nsplit)
        g11 = g[:o, :o]
        g12 = g[:o, o:2 * o]
        g22 = g[o:2 * o, o:2 * o]
        s1 = g[2 * o:2 * o + 1, :o]
        s2 = g[2 * o:2 * o + 1, o:2 * o]
    else:
        g11 = h1s.T @ h1s
        g22 = h2s.T @ h2s
        g12 = h1s.T @ h2s
        s1 = jnp.sum(h1s, axis=0, keepdims=True)
        s2 = jnp.sum(h2s, axis=0, keepdims=True)

    # Tiny (o, o) epilogue: exact one-pass covariance (on shifted data) + ridge.
    mu1 = s1 / m
    mu2 = s2 / m
    scale = 1.0 / (m - 1)
    eye = jnp.eye(o, dtype=jnp.float32)
    s11 = scale * (g11 - m * (mu1.T @ mu1)) + R1 * eye
    s22 = scale * (g22 - m * (mu2.T @ mu2)) + R2 * eye
    s12 = scale * (g12 - m * (mu1.T @ mu2))

    # TODO(synk): eigh has no Pallas TPU kernel path; computed in plain JAX.
    d1, v1 = jnp.linalg.eigh(s11)
    d2, v2 = jnp.linalg.eigh(s22)

    # Grad-safe D^{-1/2}: dropping eigenpairs with D <= eps (torch's posInd
    # filtering) is equivalent to zeroing their contribution.
    d1_inv_sqrt = jnp.where(d1 > EPS, jnp.where(d1 > EPS, d1, 1.0) ** -0.5,
                            0.0).reshape(1, o)
    d2_inv_sqrt = jnp.where(d2 > EPS, jnp.where(d2 > EPS, d2, 1.0) ** -0.5,
                            0.0).reshape(1, o)

    # Tval chain: five (o, o) matmuls, left to XLA (a pallas_call at these
    # shapes is pure launch overhead).
    s11_root_inv = (v1 * d1_inv_sqrt) @ v1.T
    s22_root_inv = (v2 * d2_inv_sqrt) @ v2.T
    tval = s11_root_inv @ s12 @ s22_root_inv
    tt = tval.T @ tval

    if use_all_singular_values:
        # torch.trace(torch.sqrt(tmp)) == sum(sqrt(diag(tmp))).
        corr = jnp.sum(jnp.sqrt(jnp.diagonal(tt)))
    else:
        tt_reg = tt + R1 * eye
        u = jnp.linalg.eigh(tt_reg)[0]
        u = jnp.where(u > EPS, u, EPS)
        topk_vals = lax.top_k(u, outdim_size)[0]
        corr = jnp.sum(jnp.sqrt(topk_vals))

    return -corr


# --------------------------------------------------------------------------
# Pure-JAX reference mirroring the PyTorch module (for validation)
# --------------------------------------------------------------------------
def _cca_loss_ref(h1, h2, outdim_size, use_all_singular_values):
    h1 = jnp.asarray(h1, jnp.float32)
    h2 = jnp.asarray(h2, jnp.float32)
    m, o = h1.shape
    h1c = h1 - jnp.mean(h1, axis=0, keepdims=True)
    h2c = h2 - jnp.mean(h2, axis=0, keepdims=True)
    eye = jnp.eye(o, dtype=jnp.float32)
    s11 = (h1c.T @ h1c) / (m - 1) + R1 * eye
    s22 = (h2c.T @ h2c) / (m - 1) + R2 * eye
    s12 = (h1c.T @ h2c) / (m - 1)
    d1, v1 = jnp.linalg.eigh(s11)
    d2, v2 = jnp.linalg.eigh(s22)
    d1i = jnp.where(d1 > EPS, jnp.where(d1 > EPS, d1, 1.0) ** -0.5, 0.0).reshape(1, o)
    d2i = jnp.where(d2 > EPS, jnp.where(d2 > EPS, d2, 1.0) ** -0.5, 0.0).reshape(1, o)
    a = (v1 * d1i) @ v1.T
    b = (v2 * d2i) @ v2.T
    tval = a @ s12 @ b
    tt = tval.T @ tval
    if use_all_singular_values:
        return -jnp.sum(jnp.sqrt(jnp.diagonal(tt)))
    tt = tt + R1 * eye
    u = jnp.linalg.eigh(tt)[0]
    u = jnp.where(u > EPS, u, EPS)
    return -jnp.sum(jnp.sqrt(lax.top_k(u, outdim_size)[0]))


if __name__ == "__main__":
    key = jax.random.PRNGKey(0)
    k1, k2 = jax.random.split(key)

    m = 2000          # number of samples (not a multiple of tile_m -> padding path)
    o = 16            # feature (output) dimension of each view
    outdim_size = 8   # top-k canonical correlations

    # Nonzero feature means exercise the pivot-shifted one-pass covariance.
    H1 = jax.random.normal(k1, (m, o), dtype=jnp.float32) + 3.0
    H2 = jax.random.normal(k2, (m, o), dtype=jnp.float32) - 1.5

    def _close(a, b, tol=2e-3):
        return bool(abs(float(a) - float(b)) <= tol * (1.0 + abs(float(b))))

    ref = jax.block_until_ready(_cca_loss_ref(H1, H2, outdim_size, False))

    # Multi-tile streaming Pallas path (4 row tiles, padded remainder).
    loss = jax.block_until_ready(
        cca_loss(H1, H2, outdim_size, False,
                 tile_m=512, nsplit=1, use_pallas=True))
    assert bool(jnp.isfinite(loss)), "loss is not finite"
    assert _close(loss, ref), (float(loss), float(ref))

    # Two-way 'parallel' split (dual-TensorCore layout on v7x; serial elsewhere).
    loss2 = jax.block_until_ready(
        cca_loss(H1, H2, outdim_size, False,
                 tile_m=512, nsplit=2, use_pallas=True))
    assert _close(loss2, ref), (float(loss2), float(ref))

    # use_all_singular_values branch through the Pallas path.
    ref_all = jax.block_until_ready(_cca_loss_ref(H1, H2, outdim_size, True))
    loss_all = jax.block_until_ready(
        cca_loss(H1, H2, outdim_size, True,
                 tile_m=512, nsplit=1, use_pallas=True))
    assert _close(loss_all, ref_all), (float(loss_all), float(ref_all))

    # Small-problem XLA fast path (no pallas_call) must agree too.
    loss_fast = jax.block_until_ready(
        cca_loss(H1, H2, outdim_size, False, use_pallas=False))
    assert _close(loss_fast, ref), (float(loss_fast), float(ref))

    print("KERNEL_OK")
</pallas_src>

<mosaic_0001>
module attributes {stable_mosaic.version = 11 : i64} {
  func.func @_gram_kernel(%arg0: i32, %arg1: i32, %arg2: memref<512x33xf32, #tpu.memory_space<vmem>>, %arg3: memref<1x33x33xf32, #tpu.memory_space<vmem>>) attributes {dimension_semantics = [#tpu.dimension_semantics<parallel>, #tpu.dimension_semantics<arbitrary>], iteration_bounds = array<i64: 1, 4>, scalar_prefetch = 0 : i64, scratch_operands = 0 : i64, tpu.core_type = #tpu.core_type<tc>, window_params = [{transform_indices = @transform_0, window_bounds = array<i64: 512, 33>}, {transform_indices = @transform_1, window_bounds = array<i64: 1, 33, 33>}]} {
    %c0_i32 = arith.constant 0 : i32
    %0 = arith.cmpi eq, %arg1, %c0_i32 : i32
    %1 = arith.extui %0 : i1 to i32
    %c0_i32_0 = arith.constant 0 : i32
    %2 = arith.cmpi ne, %1, %c0_i32_0 : i32
    scf.if %2 {
      %cst_8 = arith.constant 0.000000e+00 : f32
      %11 = vector.broadcast %cst_8 : f32 to vector<33x33xf32>
      %c0_9 = arith.constant 0 : index
      %c0_10 = arith.constant 0 : index
      %c0_11 = arith.constant 0 : index
      %12 = vector.load %arg3[%c0_9, %c0_10, %c0_11] : memref<1x33x33xf32, #tpu.memory_space<vmem>>, vector<1x33x33xf32>
      %13 = vector.shape_cast %12 : vector<1x33x33xf32> to vector<33x33xf32>
      %14 = vector.shape_cast %11 : vector<33x33xf32> to vector<1x33x33xf32>
      tpu.vector_store %arg3[%c0_9, %c0_10, %c0_11], %14 {strides = array<i32>} : memref<1x33x33xf32, #tpu.memory_space<vmem>>, vector<1x33x33xf32>,
    } else {
    }
    %c0 = arith.constant 0 : index
    %c0_1 = arith.constant 0 : index
    %3 = vector.load %arg2[%c0, %c0_1] : memref<512x33xf32, #tpu.memory_space<vmem>>, vector<512x33xf32>
    %c0_2 = arith.constant 0 : index
    %c0_3 = arith.constant 0 : index
    %c0_4 = arith.constant 0 : index
    %4 = vector.load %arg3[%c0_2, %c0_3, %c0_4] : memref<1x33x33xf32, #tpu.memory_space<vmem>>, vector<1x33x33xf32>
    %5 = vector.shape_cast %4 : vector<1x33x33xf32> to vector<33x33xf32>
    %cst = arith.constant dense<0.000000e+00> : vector<33x33xf32>
    %6 = tpu.matmul %3, %3, %cst {dimension_numbers = #tpu.dot_dimension_numbers<[0], [0], [1], [1], [0, 1, 1, 1], [], []>} : vector<512x33xf32>, vector<512x33xf32>, vector<33x33xf32> -> vector<33x33xf32>
    %7 = arith.addf %5, %6 : vector<33x33xf32>
    %c0_5 = arith.constant 0 : index
    %c0_6 = arith.constant 0 : index
    %c0_7 = arith.constant 0 : index
    %8 = vector.load %arg3[%c0_5, %c0_6, %c0_7] : memref<1x33x33xf32, #tpu.memory_space<vmem>>, vector<1x33x33xf32>
    %9 = vector.shape_cast %8 : vector<1x33x33xf32> to vector<33x33xf32>
    %10 = vector.shape_cast %7 : vector<33x33xf32> to vector<1x33x33xf32>
    tpu.vector_store %arg3[%c0_5, %c0_6, %c0_7], %10 {strides = array<i32>} : memref<1x33x33xf32, #tpu.memory_space<vmem>>, vector<1x33x33xf32>,
    return
  }
  func.func @transform_0(%arg0: i32, %arg1: i32) -> (i32, i32) {
    %c4_i32 = arith.constant 4 : i32
    %0 = arith.muli %arg0, %c4_i32 : i32
    %1 = arith.addi %0, %arg1 : i32
    %c0_i32 = arith.constant 0 : i32
    %c0_i32_0 = arith.constant 0 : i32
    return %1, %c0_i32 : i32, i32
  }
  func.func @transform_1(%arg0: i32, %arg1: i32) -> (i32, i32, i32) {
    %c0_i32 = arith.constant 0 : i32
    %c0_i32_0 = arith.constant 0 : i32
    %c0_i32_1 = arith.constant 0 : i32
    return %arg0, %c0_i32, %c0_i32_0 : i32, i32, i32
  }
}

</mosaic_0001>

<llo_original>
// kernel: tpu_custom_call.1
$region0: #{tpu_custom_call.1}
  #allocation0 [shape = 'u32[]', space=smem, size = 0x4, offset = 0x4, fixed_abs, tag = 'smem constant byte address 0x4 - core index']
  #allocation1 [shape = 'u32[144,128]{1,0:T(1,128)}', space=vmem, size = 0x12000, scoped, tag = 'internal scratch']
  %s0 = inlined_call_operand.vmem [shape: f32[2048,33], index: 0, kind: input, shape index: {}]
  %s1 = inlined_call_operand.vmem [shape: f32[1,33,33], index: 1, kind: output, shape index: {}]
  %s2 = sld [smem:[#allocation0]]
  $region41: #{tpu_custom_call.1} parent=0
    _
  %s4 = ssub.s32 1, %s2
  %s5 = scalar_select 0, %s4, %s2
  loop: start=0, step=1, limit=6
  $region2: #{tpu_custom_call.1} parent=0 // loop_pre_header
    _
  $region3: #{tpu_custom_call.1} parent=0 // loop_header
    %s7 = sphi 0, %s11
    %p8 = scmp.ge.s32.totalorder %s7, 6
    %s14 = sphi 0, %s26
    %s15 = sphi 0, %s22
    %s16 = sphi 0, %s14
    %s17 = sphi 0, %s15
    %s18 = sphi 0, %s16
    %s19 = sphi 0, %s17
    %s33 = sphi 0, %s35
    %s36 = sphi 0, %s33
    %s37 = sphi 0, %s36
    %s53 = sphi 0, %s37
    %s59 = sphi 0, %s61
    %s62 = sphi 0, %s59
    %s63 = sphi 0, %s62
    %s79 = sphi 0, %s63
  $region4: #{tpu_custom_call.1} parent=0 // loop_header_branch
    %10 = sbr.rel (%p8) target = $region8
  $region5: #{tpu_custom_call.1} parent=0 // loop_body
    %s12 = ssub.s32 %s7, 1
    %s13 = ssub.s32 %s7, 2
    %s20 = sadd.s32 1, %s15
    %p21 = scmp.ge.s32.totalorder %s20, 4
    %s22 = scalar_select %p21, 0, %s20
    %s23 = sadd.s32 1, %s14
    %s24 = scalar_select %p21, %s23, %s14
    %p25 = scmp.ge.s32.totalorder %s24, 1
    %s26 = scalar_select %p25, 0, %s24
    %s27 = smul.u32 %s14, 4
    %s28 = sadd.s32 %s27, %s15
    %s29 = smul.u32 %s26, 4
    %s30 = sadd.s32 %s29, %s22
    %s31 = ssub.s32 %s28, %s30
    %p32 = scmp.eq.s32.totalorder %s31, 0
    %s34 = sadd.s32 %s33, 1
    %s35 = scalar_select %p32, %s33, %s34
    %p38 = pneg %p32
    %p39 = scmp.eq.s32.totalorder %s7, 3
    %p40 = por %p38, %p39
    %p41 = scmp.ne.s32.totalorder %s33, %s36
    %p42 = scmp.eq.s32.totalorder %s7, 0
    %p43 = por %p41, %p42
    %p44 = scmp.ne.s32.totalorder %s33, %s36
    %p45 = scmp.eq.s32.totalorder %s12, 3
    %p46 = por %p44, %p45
    %p47 = scmp.ne.s32.totalorder %s36, %s37
    %p48 = scmp.eq.s32.totalorder %s12, 0
    %p49 = por %p47, %p48
    %p50 = scmp.ne.s32.totalorder %s36, %s37
    %p51 = scmp.eq.s32.totalorder %s13, 3
    %p52 = por %p50, %p51
    %p54 = scmp.ne.s32.totalorder %s37, %s53
    %p55 = scmp.eq.s32.totalorder %s13, 0
    %p56 = por %p54, %p55
    %s57 = ssub.s32 %s14, %s26
    %p58 = scmp.eq.s32.totalorder %s57, 0
    %s60 = sadd.s32 %s59, 1
    %s61 = scalar_select %p58, %s59, %s60
    %p64 = pneg %p58
    %p65 = scmp.eq.s32.totalorder %s7, 3
    %p66 = por %p64, %p65
    %p67 = scmp.ne.s32.totalorder %s59, %s62
    %p68 = scmp.eq.s32.totalorder %s7, 0
    %p69 = por %p67, %p68
    %p70 = scmp.ne.s32.totalorder %s59, %s62
    %p71 = scmp.eq.s32.totalorder %s12, 3
    %p72 = por %p70, %p71
    %p73 = scmp.ne.s32.totalorder %s62, %s63
    %p74 = scmp.eq.s32.totalorder %s12, 0
    %p75 = por %p73, %p74
    %p76 = scmp.ne.s32.totalorder %s62, %s63
    %p77 = scmp.eq.s32.totalorder %s13, 3
    %p78 = por %p76, %p77
    %p80 = scmp.ne.s32.totalorder %s63, %s79
    %p81 = scmp.eq.s32.totalorder %s13, 0
    %p82 = por %p80, %p81
    %p83 = scmp.le.s32.totalorder 1, %s7
    %p84 = scmp.lt.s32.totalorder %s7, 5
    %p85 = pnand %p83, %p84
    %p86 = pneg %p85
    // Predicated region
    $region9: #{tpu_custom_call.1} parent=5 // pred_check
      _
    $region10: #{tpu_custom_call.1} parent=5 // pred_check_branch
      %88 = sbr.rel (%p85) target = $region12
    $region11: #{tpu_custom_call.1} parent=5 // pred_region
      %s89 = ssub.s32 %s7, 1
    $region12: #{tpu_custom_call.1} parent=5 // pred_fallthru
      _
    %p90 = scmp.lt.s32.totalorder %s7, 4
    // Predicated region
    $region13: #{tpu_custom_call.1} parent=5 // pred_check
      %p91 = pneg %p90
    $region14: #{tpu_custom_call.1} parent=5 // pred_check_branch
      %93 = sbr.rel (%p91) target = $region16
    $region15: #{tpu_custom_call.1} parent=5 // pred_region
      // Predicated region
      $region17: #{tpu_custom_call.1} parent=15 // pred_check
        %p94 = pneg %p43
      $region18: #{tpu_custom_call.1} parent=15 // pred_check_branch
        %96 = sbr.rel (%p94) target = $region20
      $region19: #{tpu_custom_call.1} parent=15 // pred_region
        %s97 = smul.u32 %s14, 4
        %s98 = sadd.s32 %s97, %s15
        %s99 = smul.u32 64, %s98
        %p100 = scmp.lt.s32.totalorder %s99, 255
        %s101 = scalar_select %p100, %s99, 255
        %s102 = smul.addr %s101, 8
        %s103 = scalar_lea.vmem %s0, %s102
        %s104 = smul.u32 %s14, 4
        %s105 = sadd.s32 %s104, %s15
        %s106 = smul.u32 64, %s105
      $region20: #{tpu_custom_call.1} parent=15 // pred_fallthru
        _
    $region16: #{tpu_custom_call.1} parent=5 // pred_fallthru
      _
    %p107 = scmp.le.s32.totalorder 1, %s7
    %p108 = scmp.lt.s32.totalorder %s7, 5
    %p109 = pnand %p107, %p108
    %p110 = pneg %p109
    // Predicated region
    $region21: #{tpu_custom_call.1} parent=5 // pred_check
      _
    $region22: #{tpu_custom_call.1} parent=5 // pred_check_branch
      %112 = sbr.rel (%p109) target = $region24
    $region23: #{tpu_custom_call.1} parent=5 // pred_region
      %s113 = ssub.s32 %s7, 1
      %s114 = smul.u32 %s16, 4
      %s115 = sadd.s32 %s114, %s17
      %s116 = smul.u32 64, %s115
      %p117 = scmp.lt.s32.totalorder %s116, 255
      %s118 = scalar_select %p117, %s116, 255
      %s119 = smul.addr %s118, 8
      %s120 = scalar_lea.vmem %s0, %s119
      %p121 = pneg %p49
      %p122 = pneg %p46
      %p123 = pneg %p75
      %p124 = pneg %p72
      %p125 = scmp.lt.s32.totalorder %s16, 0
      %s126 = scalar_select %p125, %s16, 0
      %s127 = smul.addr %s126, 5
      %s128 = smul.addr %s127, 8
      %s129 = scalar_lea.vmem %s1, %s128
      %s130 = smul.u32 %s16, 4
      %s131 = sadd.s32 %s130, %s17
      %s132 = smul.u32 64, %s131
      %p133 = scmp.lt.s32.totalorder %s132, 255
      %s134 = scalar_select %p133, %s132, 255
      %s135 = smul.addr %s134, 8
      %s136 = scalar_lea.vmem %s0, %s135
      %s137 = smul.u32 %s16, 4
      %s138 = sadd.s32 %s137, %s17
      %s139 = smul.u32 64, %s138
      %p140 = scmp.lt.s32.totalorder %s16, 0
      %s141 = scalar_select %p140, %s16, 0
      %s142 = smul.addr %s141, 5
      %s143 = smul.addr %s142, 8
      %s144 = scalar_lea.vmem %s1, %s143
      %p145 = scmp.eq.s32.totalorder %s17, 0
      // Predicated region
      $region25: #{tpu_custom_call.1} parent=23 // pred_check
        %p146 = pneg %p145
      $region26: #{tpu_custom_call.1} parent=23 // pred_check_branch
        %148 = sbr.rel (%p146) target = $region28
      $region27: #{tpu_custom_call.1} parent=23 // pred_region
        %vm149 = vcmask 269312
        %150 = vst.msk [vmem:[%s144] sm:$0xff] %vm149, 0.0
        %151 = vst.msk [vmem:[%s144 + $0x8] sm:$0xff] %vm149, 0.0
        %152 = vst.msk [vmem:[%s144 + $0x10] sm:$0xff] %vm149, 0.0
        %153 = vst.msk [vmem:[%s144 + $0x18] sm:$0xff] %vm149, 0.0
        %vm154 = vcmask 262144
        %155 = vst.msk [vmem:[%s144 + $0x20] sm:$0x1] %vm154, 0.0
      $region28: #{tpu_custom_call.1} parent=23 // pred_fallthru
        _
      %v156 = vld [vmem:[%s136] sm:$0xff]
      %v157 = vld [vmem:[%s136 + $0x8] sm:$0xff]
      %v158 = vld [vmem:[%s136 + $0x10] sm:$0xff]
      %v159 = vld [vmem:[%s136 + $0x18] sm:$0xff]
      %v160 = vld [vmem:[%s136 + $0x20] sm:$0xff]
      %v161 = vld [vmem:[%s136 + $0x28] sm:$0xff]
      %v162 = vld [vmem:[%s136 + $0x30] sm:$0xff]
      %v163 = vld [vmem:[%s136 + $0x38] sm:$0xff]
      %v164 = vld [vmem:[%s136 + $0x40] sm:$0xff]
      %v165 = vld [vmem:[%s136 + $0x48] sm:$0xff]
      %v166 = vld [vmem:[%s136 + $0x50] sm:$0xff]
      %v167 = vld [vmem:[%s136 + $0x58] sm:$0xff]
      %v168 = vld [vmem:[%s136 + $0x60] sm:$0xff]
      %v169 = vld [vmem:[%s136 + $0x68] sm:$0xff]
      %v170 = vld [vmem:[%s136 + $0x70] sm:$0xff]
      %v171 = vld [vmem:[%s136 + $0x78] sm:$0xff]
      %v172 = vld [vmem:[%s136 + $0x80] sm:$0xff]
      %v173 = vld [vmem:[%s136 + $0x88] sm:$0xff]
      %v174 = vld [vmem:[%s136 + $0x90] sm:$0xff]
      %v175 = vld [vmem:[%s136 + $0x98] sm:$0xff]
      %v176 = vld [vmem:[%s136 + $0xa0] sm:$0xff]
      %v177 = vld [vmem:[%s136 + $0xa8] sm:$0xff]
      %v178 = vld [vmem:[%s136 + $0xb0] sm:$0xff]
      %v179 = vld [vmem:[%s136 + $0xb8] sm:$0xff]
      %v180 = vld [vmem:[%s136 + $0xc0] sm:$0xff]
      %v181 = vld [vmem:[%s136 + $0xc8] sm:$0xff]
      %v182 = vld [vmem:[%s136 + $0xd0] sm:$0xff]
      %v183 = vld [vmem:[%s136 + $0xd8] sm:$0xff]
      %v184 = vld [vmem:[%s136 + $0xe0] sm:$0xff]
      %v185 = vld [vmem:[%s136 + $0xe8] sm:$0xff]
      %v186 = vld [vmem:[%s136 + $0xf0] sm:$0xff]
      %v187 = vld [vmem:[%s136 + $0xf8] sm:$0xff]
      %v188 = vld [vmem:[%s136 + $0x100] sm:$0xff]
      %v189 = vld [vmem:[%s136 + $0x108] sm:$0xff]
      %v190 = vld [vmem:[%s136 + $0x110] sm:$0xff]
      %v191 = vld [vmem:[%s136 + $0x118] sm:$0xff]
      %v192 = vld [vmem:[%s136 + $0x120] sm:$0xff]
      %v193 = vld [vmem:[%s136 + $0x128] sm:$0xff]
      %v194 = vld [vmem:[%s136 + $0x130] sm:$0xff]
      %v195 = vld [vmem:[%s136 + $0x138] sm:$0xff]
      %v196 = vld [vmem:[%s136 + $0x140] sm:$0xff]
      %v197 = vld [vmem:[%s136 + $0x148] sm:$0xff]
      %v198 = vld [vmem:[%s136 + $0x150] sm:$0xff]
      %v199 = vld [vmem:[%s136 + $0x158] sm:$0xff]
      %v200 = vld [vmem:[%s136 + $0x160] sm:$0xff]
      %v201 = vld [vmem:[%s136 + $0x168] sm:$0xff]
      %v202 = vld [vmem:[%s136 + $0x170] sm:$0xff]
      %v203 = vld [vmem:[%s136 + $0x178] sm:$0xff]
      %v204 = vld [vmem:[%s136 + $0x180] sm:$0xff]
      %v205 = vld [vmem:[%s136 + $0x188] sm:$0xff]
      %v206 = vld [vmem:[%s136 + $0x190] sm:$0xff]
      %v207 = vld [vmem:[%s136 + $0x198] sm:$0xff]
      %v208 = vld [vmem:[%s136 + $0x1a0] sm:$0xff]
      %v209 = vld [vmem:[%s136 + $0x1a8] sm:$0xff]
      %v210 = vld [vmem:[%s136 + $0x1b0] sm:$0xff]
      %v211 = vld [vmem:[%s136 + $0x1b8] sm:$0xff]
      %v212 = vld [vmem:[%s136 + $0x1c0] sm:$0xff]
      %v213 = vld [vmem:[%s136 + $0x1c8] sm:$0xff]
      %v214 = vld [vmem:[%s136 + $0x1d0] sm:$0xff]
      %v215 = vld [vmem:[%s136 + $0x1d8] sm:$0xff]
      %v216 = vld [vmem:[%s136 + $0x1e0] sm:$0xff]
      %v217 = vld [vmem:[%s136 + $0x1e8] sm:$0xff]
      %v218 = vld [vmem:[%s136 + $0x1f0] sm:$0xff]
      %v219 = vld [vmem:[%s136 + $0x1f8] sm:$0xff]
      %v220 = vld [vmem:[%s144] sm:$0xff]
      %v221 = vld [vmem:[%s144 + $0x8] sm:$0xff]
      %v222 = vld [vmem:[%s144 + $0x10] sm:$0xff]
      %v223 = vld [vmem:[%s144 + $0x18] sm:$0xff]
      %v224 = vld [vmem:[%s144 + $0x20] sm:$0x1]
      %225 = vxpose.xlu0.b32.start [1/16] %v156, 128
      %226 = vxpose.xlu0.b32.cont [2/16] %v157, 128
      %227 = vxpose.xlu0.b32.cont [3/16] %v158, 128
      %228 = vxpose.xlu0.b32.cont [4/16] %v159, 128
      %229 = vxpose.xlu0.b32.cont [5/16] %v160, 128
      %230 = vxpose.xlu0.b32.cont [6/16] %v161, 128
      %231 = vxpose.xlu0.b32.cont [7/16] %v162, 128
      %232 = vxpose.xlu0.b32.cont [8/16] %v163, 128
      %233 = vxpose.xlu0.b32.cont [9/16] %v164, 128
      %234 = vxpose.xlu0.b32.cont [10/16] %v165, 128
      %235 = vxpose.xlu0.b32.cont [11/16] %v166, 128
      %236 = vxpose.xlu0.b32.cont [12/16] %v167, 128
      %237 = vxpose.xlu0.b32.cont [13/16] %v168, 128
      %238 = vxpose.xlu0.b32.cont [14/16] %v169, 128
      %239 = vxpose.xlu0.b32.cont [15/16] %v170, 128
      %240 = vxpose.xlu0.b32.end [16/16] %v171, 128
      %v241 = vpop.trf.xlu0
      %v242 = vpop.trf.xlu0
      %v243 = vpop.trf.xlu0
      %v244 = vpop.trf.xlu0
      %v245 = vpop.trf.xlu0
      %v246 = vpop.trf.xlu0
      %v247 = vpop.trf.xlu0
      %v248 = vpop.trf.xlu0
      %v249 = vpop.trf.xlu0
      %v250 = vpop.trf.xlu0
      %v251 = vpop.trf.xlu0
      %v252 = vpop.trf.xlu0
      %v253 = vpop.trf.xlu0
      %v254 = vpop.trf.xlu0
      %v255 = vpop.trf.xlu0
      %v256 = vpop.trf.xlu0
      %257 = vxpose.xlu0.b32.start [1/16] %v172, 128
      %258 = vxpose.xlu0.b32.cont [2/16] %v173, 128
      %259 = vxpose.xlu0.b32.cont [3/16] %v174, 128
      %260 = vxpose.xlu0.b32.cont [4/16] %v175, 128
      %261 = vxpose.xlu0.b32.cont [5/16] %v176, 128
      %262 = vxpose.xlu0.b32.cont [6/16] %v177, 128
      %263 = vxpose.xlu0.b32.cont [7/16] %v178, 128
      %264 = vxpose.xlu0.b32.cont [8/16] %v179, 128
      %265 = vxpose.xlu0.b32.cont [9/16] %v180, 128
      %266 = vxpose.xlu0.b32.cont [10/16] %v181, 128
      %267 = vxpose.xlu0.b32.cont [11/16] %v182, 128
      %268 = vxpose.xlu0.b32.cont [12/16] %v183, 128
      %269 = vxpose.xlu0.b32.cont [13/16] %v184, 128
      %270 = vxpose.xlu0.b32.cont [14/16] %v185, 128
      %271 = vxpose.xlu0.b32.cont [15/16] %v186, 128
      %272 = vxpose.xlu0.b32.end [16/16] %v187, 128
      %v273 = vpop.trf.xlu0
      %v274 = vpop.trf.xlu0
      %v275 = vpop.trf.xlu0
      %v276 = vpop.trf.xlu0
      %v277 = vpop.trf.xlu0
      %v278 = vpop.trf.xlu0
      %v279 = vpop.trf.xlu0
      %v280 = vpop.trf.xlu0
      %v281 = vpop.trf.xlu0
      %v282 = vpop.trf.xlu0
      %v283 = vpop.trf.xlu0
      %v284 = vpop.trf.xlu0
      %v285 = vpop.trf.xlu0
      %v286 = vpop.trf.xlu0
      %v287 = vpop.trf.xlu0
      %v288 = vpop.trf.xlu0
      %289 = vxpose.xlu0.b32.start [1/16] %v188, 128
      %290 = vxpose.xlu0.b32.cont [2/16] %v189, 128
      %291 = vxpose.xlu0.b32.cont [3/16] %v190, 128
      %292 = vxpose.xlu0.b32.cont [4/16] %v191, 128
      %293 = vxpose.xlu0.b32.cont [5/16] %v192, 128
      %294 = vxpose.xlu0.b32.cont [6/16] %v193, 128
      %295 = vxpose.xlu0.b32.cont [7/16] %v194, 128
      %296 = vxpose.xlu0.b32.cont [8/16] %v195, 128
      %297 = vxpose.xlu0.b32.cont [9/16] %v196, 128
      %298 = vxpose.xlu0.b32.cont [10/16] %v197, 128
      %299 = vxpose.xlu0.b32.cont [11/16] %v198, 128
      %300 = vxpose.xlu0.b32.cont [12/16] %v199, 128
      %301 = vxpose.xlu0.b32.cont [13/16] %v200, 128
      %302 = vxpose.xlu0.b32.cont [14/16] %v201, 128
      %303 = vxpose.xlu0.b32.cont [15/16] %v202, 128
      %304 = vxpose.xlu0.b32.end [16/16] %v203, 128
      %v305 = vpop.trf.xlu0
      %v306 = vpop.trf.xlu0
      %v307 = vpop.trf.xlu0
      %v308 = vpop.trf.xlu0
      %v309 = vpop.trf.xlu0
      %v310 = vpop.trf.xlu0
      %v311 = vpop.trf.xlu0
      %v312 = vpop.trf.xlu0
      %v313 = vpop.trf.xlu0
      %v314 = vpop.trf.xlu0
      %v315 = vpop.trf.xlu0
      %v316 = vpop.trf.xlu0
      %v317 = vpop.trf.xlu0
      %v318 = vpop.trf.xlu0
      %v319 = vpop.trf.xlu0
      %v320 = vpop.trf.xlu0
      %321 = vxpose.xlu0.b32.start [1/16] %v204, 128
      %322 = vxpose.xlu0.b32.cont [2/16] %v205, 128
      %323 = vxpose.xlu0.b32.cont [3/16] %v206, 128
      %324 = vxpose.xlu0.b32.cont [4/16] %v207, 128
      %325 = vxpose.xlu0.b32.cont [5/16] %v208, 128
      %326 = vxpose.xlu0.b32.cont [6/16] %v209, 128
      %327 = vxpose.xlu0.b32.cont [7/16] %v210, 128
      %328 = vxpose.xlu0.b32.cont [8/16] %v211, 128
      %329 = vxpose.xlu0.b32.cont [9/16] %v212, 128
      %330 = vxpose.xlu0.b32.cont [10/16] %v213, 128
      %331 = vxpose.xlu0.b32.cont [11/16] %v214, 128
      %332 = vxpose.xlu0.b32.cont [12/16] %v215, 128
      %333 = vxpose.xlu0.b32.cont [13/16] %v216, 128
      %334 = vxpose.xlu0.b32.cont [14/16] %v217, 128
      %335 = vxpose.xlu0.b32.cont [15/16] %v218, 128
      %336 = vxpose.xlu0.b32.end [16/16] %v219, 128
      %v337 = vpop.trf.xlu0
      %v338 = vpop.trf.xlu0
      %v339 = vpop.trf.xlu0
      %v340 = vpop.trf.xlu0
      %v341 = vpop.trf.xlu0
      %v342 = vpop.trf.xlu0
      %v343 = vpop.trf.xlu0
      %v344 = vpop.trf.xlu0
      %v345 = vpop.trf.xlu0
      %v346 = vpop.trf.xlu0
      %v347 = vpop.trf.xlu0
      %v348 = vpop.trf.xlu0
      %v349 = vpop.trf.xlu0
      %v350 = vpop.trf.xlu0
      %v351 = vpop.trf.xlu0
      %v352 = vpop.trf.xlu0
      %353 = vmatprep.subr.mxu0 0.0
      %354 = vmatpush1.msra.mxu0 %v156
      %355 = vmatprep.subr.mxu0 0.0
      %356 = vmatpush1.msra.mxu0 %v157
      %357 = vmatprep.subr.mxu0 0.0
      %358 = vmatpush1.msra.mxu0 %v158
      %359 = vmatprep.subr.mxu0 0.0
      %360 = vmatpush1.msra.mxu0 %v159
      %361 = vmatprep.subr.mxu0 0.0
      %362 = vmatpush1.msra.mxu0 %v160
      %363 = vmatprep.subr.mxu0 0.0
      %364 = vmatpush1.msra.mxu0 %v161
      %365 = vmatprep.subr.mxu0 0.0
      %366 = vmatpush1.msra.mxu0 %v162
      %367 = vmatprep.subr.mxu0 0.0
      %368 = vmatpush1.msra.mxu0 %v163
      %369 = vmatprep.subr.mxu0 0.0
      %370 = vmatpush1.msra.mxu0 %v164
      %371 = vmatprep.subr.mxu0 0.0
      %372 = vmatpush1.msra.mxu0 %v165
      %373 = vmatprep.subr.mxu0 0.0
      %374 = vmatpush1.msra.mxu0 %v166
      %375 = vmatprep.subr.mxu0 0.0
      %376 = vmatpush1.msra.mxu0 %v167
      %377 = vmatprep.subr.mxu0 0.0
      %378 = vmatpush1.msra.mxu0 %v168
      %379 = vmatprep.subr.mxu0 0.0
      %380 = vmatpush1.msra.mxu0 %v169
      %381 = vmatprep.subr.mxu0 0.0
      %382 = vmatpush1.msra.mxu0 %v170
      %383 = vmatprep.subr.mxu0 0.0
      %384 = vmatpush1.msra.mxu0 %v171
      %385 = vmatprep.subr.mxu0 0.0
      %386 = vmatpush1.msra.mxu0 %v172
      %387 = vmatprep.subr.mxu0 0.0
      %388 = vmatpush1.msra.mxu0 %v173
      %389 = vmatprep.subr.mxu0 0.0
      %390 = vmatpush1.msra.mxu0 %v174
      %391 = vmatprep.subr.mxu0 0.0
      %392 = vmatpush1.msra.mxu0 %v175
      %393 = vmatprep.subr.mxu0 0.0
      %394 = vmatpush1.msra.mxu0 %v176
      %395 = vmatprep.subr.mxu0 0.0
      %396 = vmatpush1.msra.mxu0 %v177
      %397 = vmatprep.subr.mxu0 0.0
      %398 = vmatpush1.msra.mxu0 %v178
      %399 = vmatprep.subr.mxu0 0.0
      %400 = vmatpush1.msra.mxu0 %v179
      %401 = vmatprep.subr.mxu0 0.0
      %402 = vmatpush1.msra.mxu0 %v180
      %403 = vmatprep.subr.mxu0 0.0
      %404 = vmatpush1.msra.mxu0 %v181
      %405 = vmatprep.subr.mxu0 0.0
      %406 = vmatpush1.msra.mxu0 %v182
      %407 = vmatprep.subr.mxu0 0.0
      %408 = vmatpush1.msra.mxu0 %v183
      %409 = vmatprep.subr.mxu0 0.0
      %410 = vmatpush1.msra.mxu0 %v184
      %411 = vmatprep.subr.mxu0 0.0
      %412 = vmatpush1.msra.mxu0 %v185
      %413 = vmatprep.subr.mxu0 0.0
      %414 = vmatpush1.msra.mxu0 %v186
      %415 = vmatprep.subr.mxu0 0.0
      %416 = vmatpush1.msra.mxu0 %v187
      %417 = vmatprep.mubr.f32.mxu0 %v273
      %418 = vmatmul.mubr.f32.gmra.mrb[0].mxu0 %v241
      %v419 = vpop.f32.mrb[0].mxu0
      %v420 = vadd.f32 0.0, %v419
      %v421 = vpop.f32.mrb[0].mxu0
      %422 = vmatprep.mubr.f32.mxu0 %v274
      %423 = vmatmul.mubr.f32.gmra.mrb[0].mxu0 %v242
      %v424 = vpop.f32.mrb[0].mxu0
      %v425 = vadd.f32 0.0, %v424
      %v426 = vpop.f32.mrb[0].mxu0
      %427 = vmatprep.mubr.f32.mxu0 %v275
      %428 = vmatmul.mubr.f32.gmra.mrb[0].mxu0 %v243
      %v429 = vpop.f32.mrb[0].mxu0
      %v430 = vadd.f32 0.0, %v429
      %v431 = vpop.f32.mrb[0].mxu0
      %432 = vmatprep.mubr.f32.mxu0 %v276
      %433 = vmatmul.mubr.f32.gmra.mrb[0].mxu0 %v244
      %v434 = vpop.f32.mrb[0].mxu0
      %v435 = vadd.f32 0.0, %v434
      %v436 = vpop.f32.mrb[0].mxu0
      %437 = vmatprep.mubr.f32.mxu0 %v277
      %438 = vmatmul.mubr.f32.gmra.mrb[0].mxu0 %v245
      %v439 = vpop.f32.mrb[0].mxu0
      %v440 = vadd.f32 0.0, %v439
      %v441 = vpop.f32.mrb[0].mxu0
      %442 = vdwg.mxu0
      %443 = vmatprep.subr.mxu0 0.0
      %444 = vmatpush1.msra.mxu0 %v188
      %445 = vmatprep.subr.mxu0 0.0
      %446 = vmatpush1.msra.mxu0 %v189
      %447 = vmatprep.subr.mxu0 0.0
      %448 = vmatpush1.msra.mxu0 %v190
      %449 = vmatprep.subr.mxu0 0.0
      %450 = vmatpush1.msra.mxu0 %v191
      %451 = vmatprep.subr.mxu0 0.0
      %452 = vmatpush1.msra.mxu0 %v192
      %453 = vmatprep.subr.mxu0 0.0
      %454 = vmatpush1.msra.mxu0 %v193
      %455 = vmatprep.subr.mxu0 0.0
      %456 = vmatpush1.msra.mxu0 %v194
      %457 = vmatprep.subr.mxu0 0.0
      %458 = vmatpush1.msra.mxu0 %v195
      %459 = vmatprep.subr.mxu0 0.0
      %460 = vmatpush1.msra.mxu0 %v196
      %461 = vmatprep.subr.mxu0 0.0
      %462 = vmatpush1.msra.mxu0 %v197
      %463 = vmatprep.subr.mxu0 0.0
      %464 = vmatpush1.msra.mxu0 %v198
      %465 = vmatprep.subr.mxu0 0.0
      %466 = vmatpush1.msra.mxu0 %v199
      %467 = vmatprep.subr.mxu0 0.0
      %468 = vmatpush1.msra.mxu0 %v200
      %469 = vmatprep.subr.mxu0 0.0
      %470 = vmatpush1.msra.mxu0 %v201
      %471 = vmatprep.subr.mxu0 0.0
      %472 = vmatpush1.msra.mxu0 %v202
      %473 = vmatprep.subr.mxu0 0.0
      %474 = vmatpush1.msra.mxu0 %v203
      %475 = vmatprep.subr.mxu0 0.0
      %476 = vmatpush1.msra.mxu0 %v204
      %477 = vmatprep.subr.mxu0 0.0
      %478 = vmatpush1.msra.mxu0 %v205
      %479 = vmatprep.subr.mxu0 0.0
      %480 = vmatpush1.msra.mxu0 %v206
      %481 = vmatprep.subr.mxu0 0.0
      %482 = vmatpush1.msra.mxu0 %v207
      %483 = vmatprep.subr.mxu0 0.0
      %484 = vmatpush1.msra.mxu0 %v208
      %485 = vmatprep.subr.mxu0 0.0
      %486 = vmatpush1.msra.mxu0 %v209
      %487 = vmatprep.subr.mxu0 0.0
      %488 = vmatpush1.msra.mxu0 %v210
      %489 = vmatprep.subr.mxu0 0.0
      %490 = vmatpush1.msra.mxu0 %v211
      %491 = vmatprep.subr.mxu0 0.0
      %492 = vmatpush1.msra.mxu0 %v212
      %493 = vmatprep.subr.mxu0 0.0
      %494 = vmatpush1.msra.mxu0 %v213
      %495 = vmatprep.subr.mxu0 0.0
      %496 = vmatpush1.msra.mxu0 %v214
      %497 = vmatprep.subr.mxu0 0.0
      %498 = vmatpush1.msra.mxu0 %v215
      %499 = vmatprep.subr.mxu0 0.0
      %500 = vmatpush1.msra.mxu0 %v216
      %501 = vmatprep.subr.mxu0 0.0
      %502 = vmatpush1.msra.mxu0 %v217
      %503 = vmatprep.subr.mxu0 0.0
      %504 = vmatpush1.msra.mxu0 %v218
      %505 = vmatprep.subr.mxu0 0.0
      %506 = vmatpush1.msra.mxu0 %v219
      %507 = vmatprep.mubr.f32.mxu0 %v337
      %508 = vmatmul.mubr.f32.gmra.mrb[0].mxu0 %v305
      %v509 = vpop.f32.mrb[0].mxu0
      %v510 = vadd.f32 %v420, %v509
      %v511 = vpop.f32.mrb[0].mxu0
      %512 = vmatprep.mubr.f32.mxu0 %v338
      %513 = vmatmul.mubr.f32.gmra.mrb[0].mxu0 %v306
      %v514 = vpop.f32.mrb[0].mxu0
      %v515 = vadd.f32 %v425, %v514
      %v516 = vpop.f32.mrb[0].mxu0
      %517 = vmatprep.mubr.f32.mxu0 %v339
      %518 = vmatmul.mubr.f32.gmra.mrb[0].mxu0 %v307
      %v519 = vpop.f32.mrb[0].mxu0
      %v520 = vadd.f32 %v430, %v519
      %v521 = vpop.f32.mrb[0].mxu0
      %522 = vmatprep.mubr.f32.mxu0 %v340
      %523 = vmatmul.mubr.f32.gmra.mrb[0].mxu0 %v308
      %v524 = vpop.f32.mrb[0].mxu0
      %v525 = vadd.f32 %v435, %v524
      %v526 = vpop.f32.mrb[0].mxu0
      %527 = vmatprep.mubr.f32.mxu0 %v341
      %528 = vmatmul.mubr.f32.gmra.mrb[0].mxu0 %v309
      %v529 = vpop.f32.mrb[0].mxu0
      %v530 = vadd.f32 %v440, %v529
      %v531 = vpop.f32.mrb[0].mxu0
      %532 = vdwg.mxu0
      %v533 = vadd.f32 %v220, %v510
      %v534 = vadd.f32 %v221, %v515
      %v535 = vadd.f32 %v222, %v520
      %v536 = vadd.f32 %v223, %v525
      %v537 = vadd.f32 %v224, %v530
      %vm538 = vcmask 269312
      %539 = vst.msk [vmem:[%s144] sm:$0xff] %vm538, %v533
      %540 = vst.msk [vmem:[%s144 + $0x8] sm:$0xff] %vm538, %v534
      %541 = vst.msk [vmem:[%s144 + $0x10] sm:$0xff] %vm538, %v535
      %542 = vst.msk [vmem:[%s144 + $0x18] sm:$0xff] %vm538, %v536
      %vm543 = vcmask 262144
      %544 = vst.msk [vmem:[%s144 + $0x20] sm:$0x1] %vm543, %v537
      %p545 = scmp.lt.s32.totalorder %s16, 0
      %s546 = scalar_select %p545, %s16, 0
      %s547 = smul.addr %s546, 5
      %s548 = smul.addr %s547, 8
      %s549 = scalar_lea.vmem %s1, %s548
      // Predicated region
      $region29: #{tpu_custom_call.1} parent=23 // pred_check
        %p550 = pneg %p72
      $region30: #{tpu_custom_call.1} parent=23 // pred_check_branch
        %552 = sbr.rel (%p550) target = $region32
      $region31: #{tpu_custom_call.1} parent=23 // pred_region
        _
      $region32: #{tpu_custom_call.1} parent=23 // pred_fallthru
        _
      // Predicated region
      $region33: #{tpu_custom_call.1} parent=23 // pred_check
        %p553 = pneg %p72
      $region34: #{tpu_custom_call.1} parent=23 // pred_check_branch
        %555 = sbr.rel (%p553) target = $region36
      $region35: #{tpu_custom_call.1} parent=23 // pred_region
        %p556 = scmp.lt.s32.totalorder %s16, 0
        %s557 = scalar_select %p556, %s16, 0
        %s558 = smul.addr %s557, 5
        %s559 = smul.addr %s558, 8
        %s560 = scalar_lea.vmem %s1, %s559
      $region36: #{tpu_custom_call.1} parent=23 // pred_fallthru
        _
    $region24: #{tpu_custom_call.1} parent=5 // pred_fallthru
      _
    %p561 = scmp.le.s32.totalorder 2, %s7
    // Predicated region
    $region37: #{tpu_custom_call.1} parent=5 // pred_check
      %p562 = pneg %p561
    $region38: #{tpu_custom_call.1} parent=5 // pred_check_branch
      %564 = sbr.rel (%p562) target = $region40
    $region39: #{tpu_custom_call.1} parent=5 // pred_region
      %s565 = ssub.s32 %s7, 2
    $region40: #{tpu_custom_call.1} parent=5 // pred_fallthru
      _
  $region6: #{tpu_custom_call.1} parent=0 // loop_footer
    %s11 = sadd.s32 1, %s7
  $region7: #{tpu_custom_call.1} parent=0 // loop_footer_branch
    %6 = sbr.rel target = $region3
  $region8: #{tpu_custom_call.1} parent=0 // loop_exit
    _

</llo_original>
